<compile_context>
chip_gen: v7x
topology: tpu7x:2x2x1
jax: 0.10.0
libtpu: 0.0.40
codegen_flags: <defaults>
</compile_context>

<pallas_src>
import functools

import jax
import jax.numpy as jnp
from jax import lax
from jax.experimental import pallas as pl
from jax.experimental.pallas import tpu as pltpu


def _sepconv_kernel(x_ref, m_ref, wd1_ref, wp1_ref, wd2_ref, wp2_ref, o_ref,
                    *, W, K, pad):
    """One grid step processes a group of whole images.

    x_ref  : (C_in , Lb)   input slab; lane axis = flattened (img, h, w)
    m_ref  : (K*K  , Lb)   1.0 where the tap's source pixel is inside the image
    wd1_ref: (C_in , K*K)  depthwise-1 taps (per channel)
    wp1_ref: (C_in , C_in) pointwise-1 weights (rows = out ch, cols = in ch)
    wd2_ref: (C_in , K*K)  depthwise-2 taps
    wp2_ref: (C_out, C_in) pointwise-2 weights
    o_ref  : (C_out, Lb)   output slab (lane-dense -> unmasked stores)
    """
    x = x_ref[...]                      # (C_in, Lb) f32
    masks = m_ref[...]                  # (K*K, Lb)  f32
    Lb = x.shape[-1]

    def dwconv(v, w):                   # v: (C, Lb), w: (C, K*K)
        acc = None
        for kh in range(K):
            for kw in range(K):
                t = kh * K + kw
                off = (kh - pad) * W + (kw - pad)
                if off == 0:
                    # center tap: no shift, mask is all-ones
                    tap = v * w[:, t:t + 1]
                else:
                    # shifted[p] = v[p + off]  (jnp.roll convention: out[i]=x[i-s])
                    s = pltpu.roll(v, (-off) % Lb, axis=1)
                    tap = s * masks[t:t + 1, :] * w[:, t:t + 1]
                acc = tap if acc is None else acc + tap
        return acc

    def pwconv(v, w):                   # v: (Ci, Lb), w: (Co, Ci) -> (Co, Lb)
        acc = w[:, 0:1] * v[0:1, :]     # broadcast MAC; tiny C -> VPU beats MXU
        for i in range(1, v.shape[0]):
            acc = acc + w[:, i:i + 1] * v[i:i + 1, :]
        return acc

    h = dwconv(x, wd1_ref[...])         # depthwise KxK (stride 1)
    h = pwconv(h, wp1_ref[...])         # 1x1, C_in -> C_in
    h = jnp.maximum(h, 0.0)             # ReLU
    h = dwconv(h, wd2_ref[...])         # depthwise KxK (stride 1)
    o_ref[...] = pwconv(h, wp2_ref[...]).astype(o_ref.dtype)   # 1x1 -> C_out


def sepconv_forward(x_nchw, w_dw1, w_pw1, w_dw2, w_pw2, stride, padding):
    """x: (N,C,H,W); weights in PyTorch layouts:
       w_dw1/w_dw2: (C,1,K,K)  w_pw1: (C,C,1,1)  w_pw2: (C_out,C,1,1)."""
    N, C, H, W = x_nchw.shape
    C_out = int(w_pw2.shape[0])
    K = int(w_dw1.shape[2])
    pad = int(padding)

    if stride != 1 or 2 * pad != K - 1:
        # TODO(synk): strided / non-size-preserving depthwise geometry is not
        # implemented in the fused lane-shift Pallas path.
        raise NotImplementedError("Pallas SepConv path supports stride=1, "
                                  "padding=(kernel_size-1)//2 only.")

    L_img = H * W
    L = N * L_img

    # ---- glue: lane-dense layout + flattened weights (plain JAX) -----------
    x2d = jnp.transpose(x_nchw, (1, 0, 2, 3)).reshape(C, L)       # (C, N*H*W)
    wd1 = w_dw1.reshape(C, K * K)
    wp1 = w_pw1.reshape(C, C)
    wd2 = w_dw2.reshape(C, K * K)
    wp2 = w_pw2.reshape(C_out, C)

    # Per-tap validity masks (implicit zero padding); computed once as glue so
    # the kernel needs only mul/add/roll (no vector int div/mod on TPU).
    hh = jnp.arange(H)
    ww = jnp.arange(W)
    mask_rows = []
    for kh in range(K):
        for kw in range(K):
            dh, dw = kh - pad, kw - pad
            mr = ((hh + dh >= 0) & (hh + dh < H)).astype(jnp.float32)   # (H,)
            mc = ((ww + dw >= 0) & (ww + dw < W)).astype(jnp.float32)   # (W,)
            m = (mr[:, None] * mc[None, :]).reshape(L_img)
            mask_rows.append(jnp.tile(m, N))                            # (L,)
    masks = jnp.stack(mask_rows, axis=0)                                # (K*K, L)

    # ---- batch-group tiling: whole images per block keep roll+mask local ---
    nb = N
    if L_img % 128 == 0 and N > 1:
        per_img_bytes = (C + C_out + K * K) * L_img * 4
        cap = max(1, (2 * 1024 * 1024) // per_img_bytes)   # ~2 MiB of blocks/step
        nb = min(N, cap)
        while N % nb:
            nb -= 1
    Lb = nb * L_img
    grid = (N // nb,)

    block_bytes = (C + C_out + K * K) * Lb * 4
    vmem_limit = int(min(32 * 1024 * 1024, max(8 * 1024 * 1024, 16 * block_bytes)))

    kernel = functools.partial(_sepconv_kernel, W=W, K=K, pad=pad)

    out2d = pl.pallas_call(
        kernel,
        out_shape=jax.ShapeDtypeStruct((C_out, L), x_nchw.dtype),
        grid_spec=pltpu.PrefetchScalarGridSpec(
            num_scalar_prefetch=0,
            grid=grid,
            in_specs=[
                pl.BlockSpec((C, Lb), lambda i: (0, i)),          # x slab
                pl.BlockSpec((K * K, Lb), lambda i: (0, i)),      # border masks
                pl.BlockSpec((C, K * K), lambda i: (0, 0)),       # dw1 (resident)
                pl.BlockSpec((C, C), lambda i: (0, 0)),           # pw1
                pl.BlockSpec((C, K * K), lambda i: (0, 0)),       # dw2
                pl.BlockSpec((C_out, C), lambda i: (0, 0)),       # pw2
            ],
            out_specs=pl.BlockSpec((C_out, Lb), lambda i: (0, i)),
        ),
        compiler_params=pltpu.CompilerParams(
            dimension_semantics=("parallel",),
            vmem_limit_bytes=vmem_limit,
        ),
    )(x2d, masks, wd1, wp1, wd2, wp2)

    return jnp.transpose(out2d.reshape(C_out, N, H, W), (1, 0, 2, 3))   # NCHW


def _ref_forward(x, w_dw1, w_pw1, w_dw2, w_pw2, stride, padding):
    """Pure-JAX reference matching the PyTorch SepConv (NCHW / OIHW)."""
    dn = ('NCHW', 'OIHW', 'NCHW')
    prec = lax.Precision.HIGHEST

    def conv(inp, w, s, p, groups):
        return lax.conv_general_dilated(
            inp, w, window_strides=(s, s), padding=[(p, p), (p, p)],
            dimension_numbers=dn, feature_group_count=groups, precision=prec)

    C_in = x.shape[1]
    h = conv(x, w_dw1, stride, padding, C_in)   # depthwise
    h = conv(h, w_pw1, 1, 0, 1)                 # 1x1
    h = jnp.maximum(h, 0.0)                     # ReLU
    h = conv(h, w_dw2, 1, padding, C_in)        # depthwise
    return conv(h, w_pw2, 1, 0, 1)              # 1x1 -> C_out


if __name__ == "__main__":
    N, C_IN, C_OUT, H, W = 2, 4, 8, 16, 16
    K, STRIDE, PAD = 3, 1, 1

    key = jax.random.PRNGKey(0)
    kx, k1, k2, k3, k4 = jax.random.split(key, 5)

    x = jax.random.normal(kx, (N, C_IN, H, W), dtype=jnp.float32)

    def u(k, shape, fan_in):
        b = 1.0 / (fan_in ** 0.5)
        return jax.random.uniform(k, shape, minval=-b, maxval=b, dtype=jnp.float32)

    w_dw1 = u(k1, (C_IN, 1, K, K), K * K)        # Conv2d(C,C,K, groups=C)
    w_pw1 = u(k2, (C_IN, C_IN, 1, 1), C_IN)      # Conv2d(C,C,1)
    w_dw2 = u(k3, (C_IN, 1, K, K), K * K)        # Conv2d(C,C,K, groups=C)
    w_pw2 = u(k4, (C_OUT, C_IN, 1, 1), C_IN)     # Conv2d(C,C_out,1)

    out = sepconv_forward(x, w_dw1, w_pw1, w_dw2, w_pw2, STRIDE, PAD)
    out = jax.block_until_ready(out)

    ref = jax.block_until_ready(
        _ref_forward(x, w_dw1, w_pw1, w_dw2, w_pw2, STRIDE, PAD))
    assert out.shape == (N, C_OUT, H, W)
    assert jnp.allclose(out, ref, atol=1e-4, rtol=1e-4), "mismatch vs JAX reference"

    print("KERNEL_OK")
</pallas_src>

<mosaic_0001>
module attributes {stable_mosaic.version = 11 : i64} {
  func.func @_sepconv_kernel(%arg0: i32, %arg1: memref<4x512xf32, #tpu.memory_space<vmem>>, %arg2: memref<9x512xf32, #tpu.memory_space<vmem>>, %arg3: memref<4x9xf32, #tpu.memory_space<vmem>>, %arg4: memref<4x4xf32, #tpu.memory_space<vmem>>, %arg5: memref<4x9xf32, #tpu.memory_space<vmem>>, %arg6: memref<8x4xf32, #tpu.memory_space<vmem>>, %arg7: memref<8x512xf32, #tpu.memory_space<vmem>>) attributes {dimension_semantics = [#tpu.dimension_semantics<parallel>], iteration_bounds = array<i64: 1>, scalar_prefetch = 0 : i64, scratch_operands = 0 : i64, tpu.core_type = #tpu.core_type<tc>, window_params = [{transform_indices = @transform_0, window_bounds = array<i64: 4, 512>}, {transform_indices = @transform_1, window_bounds = array<i64: 9, 512>}, {pipeline_mode = #tpu.pipeline_mode<synchronous>, transform_indices = @transform_2, window_bounds = array<i64: 4, 9>}, {pipeline_mode = #tpu.pipeline_mode<synchronous>, transform_indices = @transform_3, window_bounds = array<i64: 4, 4>}, {pipeline_mode = #tpu.pipeline_mode<synchronous>, transform_indices = @transform_4, window_bounds = array<i64: 4, 9>}, {pipeline_mode = #tpu.pipeline_mode<synchronous>, transform_indices = @transform_5, window_bounds = array<i64: 8, 4>}, {transform_indices = @transform_6, window_bounds = array<i64: 8, 512>}]} {
    %c0 = arith.constant 0 : index
    %c0_0 = arith.constant 0 : index
    %0 = vector.load %arg1[%c0, %c0_0] : memref<4x512xf32, #tpu.memory_space<vmem>>, vector<4x512xf32>
    %c0_1 = arith.constant 0 : index
    %c0_2 = arith.constant 0 : index
    %1 = vector.load %arg2[%c0_1, %c0_2] : memref<9x512xf32, #tpu.memory_space<vmem>>, vector<9x512xf32>
    %c0_3 = arith.constant 0 : index
    %c0_4 = arith.constant 0 : index
    %2 = vector.load %arg3[%c0_3, %c0_4] : memref<4x9xf32, #tpu.memory_space<vmem>>, vector<4x9xf32>
    %c17_i32 = arith.constant 17 : i32
    %3 = tpu.dynamic_rotate %0 by %c17_i32 dim 1 : vector<4x512xf32>, i32 -> vector<4x512xf32>
    %4 = vector.extract_strided_slice %1 {offsets = [0, 0], sizes = [1, 512], strides = [1, 1]} : vector<9x512xf32> to vector<1x512xf32>
    %5 = vector.broadcast %4 : vector<1x512xf32> to vector<4x512xf32>
    %6 = arith.mulf %3, %5 : vector<4x512xf32>
    %7 = vector.extract_strided_slice %2 {offsets = [0, 0], sizes = [4, 1], strides = [1, 1]} : vector<4x9xf32> to vector<4x1xf32>
    %8 = vector.broadcast %7 : vector<4x1xf32> to vector<4x512xf32>
    %9 = arith.mulf %6, %8 : vector<4x512xf32>
    %c16_i32 = arith.constant 16 : i32
    %10 = tpu.dynamic_rotate %0 by %c16_i32 dim 1 : vector<4x512xf32>, i32 -> vector<4x512xf32>
    %11 = vector.extract_strided_slice %1 {offsets = [1, 0], sizes = [1, 512], strides = [1, 1]} : vector<9x512xf32> to vector<1x512xf32>
    %12 = vector.broadcast %11 : vector<1x512xf32> to vector<4x512xf32>
    %13 = arith.mulf %10, %12 : vector<4x512xf32>
    %14 = vector.extract_strided_slice %2 {offsets = [0, 1], sizes = [4, 1], strides = [1, 1]} : vector<4x9xf32> to vector<4x1xf32>
    %15 = vector.broadcast %14 : vector<4x1xf32> to vector<4x512xf32>
    %16 = arith.mulf %13, %15 : vector<4x512xf32>
    %17 = arith.addf %9, %16 : vector<4x512xf32>
    %c15_i32 = arith.constant 15 : i32
    %18 = tpu.dynamic_rotate %0 by %c15_i32 dim 1 : vector<4x512xf32>, i32 -> vector<4x512xf32>
    %19 = vector.extract_strided_slice %1 {offsets = [2, 0], sizes = [1, 512], strides = [1, 1]} : vector<9x512xf32> to vector<1x512xf32>
    %20 = vector.broadcast %19 : vector<1x512xf32> to vector<4x512xf32>
    %21 = arith.mulf %18, %20 : vector<4x512xf32>
    %22 = vector.extract_strided_slice %2 {offsets = [0, 2], sizes = [4, 1], strides = [1, 1]} : vector<4x9xf32> to vector<4x1xf32>
    %23 = vector.broadcast %22 : vector<4x1xf32> to vector<4x512xf32>
    %24 = arith.mulf %21, %23 : vector<4x512xf32>
    %25 = arith.addf %17, %24 : vector<4x512xf32>
    %c1_i32 = arith.constant 1 : i32
    %26 = tpu.dynamic_rotate %0 by %c1_i32 dim 1 : vector<4x512xf32>, i32 -> vector<4x512xf32>
    %27 = vector.extract_strided_slice %1 {offsets = [3, 0], sizes = [1, 512], strides = [1, 1]} : vector<9x512xf32> to vector<1x512xf32>
    %28 = vector.broadcast %27 : vector<1x512xf32> to vector<4x512xf32>
    %29 = arith.mulf %26, %28 : vector<4x512xf32>
    %30 = vector.extract_strided_slice %2 {offsets = [0, 3], sizes = [4, 1], strides = [1, 1]} : vector<4x9xf32> to vector<4x1xf32>
    %31 = vector.broadcast %30 : vector<4x1xf32> to vector<4x512xf32>
    %32 = arith.mulf %29, %31 : vector<4x512xf32>
    %33 = arith.addf %25, %32 : vector<4x512xf32>
    %34 = vector.extract_strided_slice %2 {offsets = [0, 4], sizes = [4, 1], strides = [1, 1]} : vector<4x9xf32> to vector<4x1xf32>
    %35 = vector.broadcast %34 : vector<4x1xf32> to vector<4x512xf32>
    %36 = arith.mulf %0, %35 : vector<4x512xf32>
    %37 = arith.addf %33, %36 : vector<4x512xf32>
    %c511_i32 = arith.constant 511 : i32
    %38 = tpu.dynamic_rotate %0 by %c511_i32 dim 1 : vector<4x512xf32>, i32 -> vector<4x512xf32>
    %39 = vector.extract_strided_slice %1 {offsets = [5, 0], sizes = [1, 512], strides = [1, 1]} : vector<9x512xf32> to vector<1x512xf32>
    %40 = vector.broadcast %39 : vector<1x512xf32> to vector<4x512xf32>
    %41 = arith.mulf %38, %40 : vector<4x512xf32>
    %42 = vector.extract_strided_slice %2 {offsets = [0, 5], sizes = [4, 1], strides = [1, 1]} : vector<4x9xf32> to vector<4x1xf32>
    %43 = vector.broadcast %42 : vector<4x1xf32> to vector<4x512xf32>
    %44 = arith.mulf %41, %43 : vector<4x512xf32>
    %45 = arith.addf %37, %44 : vector<4x512xf32>
    %c497_i32 = arith.constant 497 : i32
    %46 = tpu.dynamic_rotate %0 by %c497_i32 dim 1 : vector<4x512xf32>, i32 -> vector<4x512xf32>
    %47 = vector.extract_strided_slice %1 {offsets = [6, 0], sizes = [1, 512], strides = [1, 1]} : vector<9x512xf32> to vector<1x512xf32>
    %48 = vector.broadcast %47 : vector<1x512xf32> to vector<4x512xf32>
    %49 = arith.mulf %46, %48 : vector<4x512xf32>
    %50 = vector.extract_strided_slice %2 {offsets = [0, 6], sizes = [4, 1], strides = [1, 1]} : vector<4x9xf32> to vector<4x1xf32>
    %51 = vector.broadcast %50 : vector<4x1xf32> to vector<4x512xf32>
    %52 = arith.mulf %49, %51 : vector<4x512xf32>
    %53 = arith.addf %45, %52 : vector<4x512xf32>
    %c496_i32 = arith.constant 496 : i32
    %54 = tpu.dynamic_rotate %0 by %c496_i32 dim 1 : vector<4x512xf32>, i32 -> vector<4x512xf32>
    %55 = vector.extract_strided_slice %1 {offsets = [7, 0], sizes = [1, 512], strides = [1, 1]} : vector<9x512xf32> to vector<1x512xf32>
    %56 = vector.broadcast %55 : vector<1x512xf32> to vector<4x512xf32>
    %57 = arith.mulf %54, %56 : vector<4x512xf32>
    %58 = vector.extract_strided_slice %2 {offsets = [0, 7], sizes = [4, 1], strides = [1, 1]} : vector<4x9xf32> to vector<4x1xf32>
    %59 = vector.broadcast %58 : vector<4x1xf32> to vector<4x512xf32>
    %60 = arith.mulf %57, %59 : vector<4x512xf32>
    %61 = arith.addf %53, %60 : vector<4x512xf32>
    %c495_i32 = arith.constant 495 : i32
    %62 = tpu.dynamic_rotate %0 by %c495_i32 dim 1 : vector<4x512xf32>, i32 -> vector<4x512xf32>
    %63 = vector.extract_strided_slice %1 {offsets = [8, 0], sizes = [1, 512], strides = [1, 1]} : vector<9x512xf32> to vector<1x512xf32>
    %64 = vector.broadcast %63 : vector<1x512xf32> to vector<4x512xf32>
    %65 = arith.mulf %62, %64 : vector<4x512xf32>
    %66 = vector.extract_strided_slice %2 {offsets = [0, 8], sizes = [4, 1], strides = [1, 1]} : vector<4x9xf32> to vector<4x1xf32>
    %67 = vector.broadcast %66 : vector<4x1xf32> to vector<4x512xf32>
    %68 = arith.mulf %65, %67 : vector<4x512xf32>
    %69 = arith.addf %61, %68 : vector<4x512xf32>
    %c0_5 = arith.constant 0 : index
    %c0_6 = arith.constant 0 : index
    %70 = vector.load %arg4[%c0_5, %c0_6] : memref<4x4xf32, #tpu.memory_space<vmem>>, vector<4x4xf32>
    %71 = vector.extract_strided_slice %70 {offsets = [0, 0], sizes = [4, 1], strides = [1, 1]} : vector<4x4xf32> to vector<4x1xf32>
    %72 = vector.extract_strided_slice %69 {offsets = [0, 0], sizes = [1, 512], strides = [1, 1]} : vector<4x512xf32> to vector<1x512xf32>
    %73 = vector.broadcast %71 : vector<4x1xf32> to vector<4x512xf32>
    %74 = vector.broadcast %72 : vector<1x512xf32> to vector<4x512xf32>
    %75 = arith.mulf %73, %74 : vector<4x512xf32>
    %76 = vector.extract_strided_slice %70 {offsets = [0, 1], sizes = [4, 1], strides = [1, 1]} : vector<4x4xf32> to vector<4x1xf32>
    %77 = vector.extract_strided_slice %69 {offsets = [1, 0], sizes = [1, 512], strides = [1, 1]} : vector<4x512xf32> to vector<1x512xf32>
    %78 = vector.broadcast %76 : vector<4x1xf32> to vector<4x512xf32>
    %79 = vector.broadcast %77 : vector<1x512xf32> to vector<4x512xf32>
    %80 = arith.mulf %78, %79 : vector<4x512xf32>
    %81 = arith.addf %75, %80 : vector<4x512xf32>
    %82 = vector.extract_strided_slice %70 {offsets = [0, 2], sizes = [4, 1], strides = [1, 1]} : vector<4x4xf32> to vector<4x1xf32>
    %83 = vector.extract_strided_slice %69 {offsets = [2, 0], sizes = [1, 512], strides = [1, 1]} : vector<4x512xf32> to vector<1x512xf32>
    %84 = vector.broadcast %82 : vector<4x1xf32> to vector<4x512xf32>
    %85 = vector.broadcast %83 : vector<1x512xf32> to vector<4x512xf32>
    %86 = arith.mulf %84, %85 : vector<4x512xf32>
    %87 = arith.addf %81, %86 : vector<4x512xf32>
    %88 = vector.extract_strided_slice %70 {offsets = [0, 3], sizes = [4, 1], strides = [1, 1]} : vector<4x4xf32> to vector<4x1xf32>
    %89 = vector.extract_strided_slice %69 {offsets = [3, 0], sizes = [1, 512], strides = [1, 1]} : vector<4x512xf32> to vector<1x512xf32>
    %90 = vector.broadcast %88 : vector<4x1xf32> to vector<4x512xf32>
    %91 = vector.broadcast %89 : vector<1x512xf32> to vector<4x512xf32>
    %92 = arith.mulf %90, %91 : vector<4x512xf32>
    %93 = arith.addf %87, %92 : vector<4x512xf32>
    %cst = arith.constant 0.000000e+00 : f32
    %94 = vector.broadcast %cst : f32 to vector<4x512xf32>
    %95 = arith.maximumf %93, %94 : vector<4x512xf32>
    %c0_7 = arith.constant 0 : index
    %c0_8 = arith.constant 0 : index
    %96 = vector.load %arg5[%c0_7, %c0_8] : memref<4x9xf32, #tpu.memory_space<vmem>>, vector<4x9xf32>
    %c17_i32_9 = arith.constant 17 : i32
    %97 = tpu.dynamic_rotate %95 by %c17_i32_9 dim 1 : vector<4x512xf32>, i32 -> vector<4x512xf32>
    %98 = vector.extract_strided_slice %1 {offsets = [0, 0], sizes = [1, 512], strides = [1, 1]} : vector<9x512xf32> to vector<1x512xf32>
    %99 = vector.broadcast %98 : vector<1x512xf32> to vector<4x512xf32>
    %100 = arith.mulf %97, %99 : vector<4x512xf32>
    %101 = vector.extract_strided_slice %96 {offsets = [0, 0], sizes = [4, 1], strides = [1, 1]} : vector<4x9xf32> to vector<4x1xf32>
    %102 = vector.broadcast %101 : vector<4x1xf32> to vector<4x512xf32>
    %103 = arith.mulf %100, %102 : vector<4x512xf32>
    %c16_i32_10 = arith.constant 16 : i32
    %104 = tpu.dynamic_rotate %95 by %c16_i32_10 dim 1 : vector<4x512xf32>, i32 -> vector<4x512xf32>
    %105 = vector.extract_strided_slice %1 {offsets = [1, 0], sizes = [1, 512], strides = [1, 1]} : vector<9x512xf32> to vector<1x512xf32>
    %106 = vector.broadcast %105 : vector<1x512xf32> to vector<4x512xf32>
    %107 = arith.mulf %104, %106 : vector<4x512xf32>
    %108 = vector.extract_strided_slice %96 {offsets = [0, 1], sizes = [4, 1], strides = [1, 1]} : vector<4x9xf32> to vector<4x1xf32>
    %109 = vector.broadcast %108 : vector<4x1xf32> to vector<4x512xf32>
    %110 = arith.mulf %107, %109 : vector<4x512xf32>
    %111 = arith.addf %103, %110 : vector<4x512xf32>
    %c15_i32_11 = arith.constant 15 : i32
    %112 = tpu.dynamic_rotate %95 by %c15_i32_11 dim 1 : vector<4x512xf32>, i32 -> vector<4x512xf32>
    %113 = vector.extract_strided_slice %1 {offsets = [2, 0], sizes = [1, 512], strides = [1, 1]} : vector<9x512xf32> to vector<1x512xf32>
    %114 = vector.broadcast %113 : vector<1x512xf32> to vector<4x512xf32>
    %115 = arith.mulf %112, %114 : vector<4x512xf32>
    %116 = vector.extract_strided_slice %96 {offsets = [0, 2], sizes = [4, 1], strides = [1, 1]} : vector<4x9xf32> to vector<4x1xf32>
    %117 = vector.broadcast %116 : vector<4x1xf32> to vector<4x512xf32>
    %118 = arith.mulf %115, %117 : vector<4x512xf32>
    %119 = arith.addf %111, %118 : vector<4x512xf32>
    %c1_i32_12 = arith.constant 1 : i32
    %120 = tpu.dynamic_rotate %95 by %c1_i32_12 dim 1 : vector<4x512xf32>, i32 -> vector<4x512xf32>
    %121 = vector.extract_strided_slice %1 {offsets = [3, 0], sizes = [1, 512], strides = [1, 1]} : vector<9x512xf32> to vector<1x512xf32>
    %122 = vector.broadcast %121 : vector<1x512xf32> to vector<4x512xf32>
    %123 = arith.mulf %120, %122 : vector<4x512xf32>
    %124 = vector.extract_strided_slice %96 {offsets = [0, 3], sizes = [4, 1], strides = [1, 1]} : vector<4x9xf32> to vector<4x1xf32>
    %125 = vector.broadcast %124 : vector<4x1xf32> to vector<4x512xf32>
    %126 = arith.mulf %123, %125 : vector<4x512xf32>
    %127 = arith.addf %119, %126 : vector<4x512xf32>
    %128 = vector.extract_strided_slice %96 {offsets = [0, 4], sizes = [4, 1], strides = [1, 1]} : vector<4x9xf32> to vector<4x1xf32>
    %129 = vector.broadcast %128 : vector<4x1xf32> to vector<4x512xf32>
    %130 = arith.mulf %95, %129 : vector<4x512xf32>
    %131 = arith.addf %127, %130 : vector<4x512xf32>
    %c511_i32_13 = arith.constant 511 : i32
    %132 = tpu.dynamic_rotate %95 by %c511_i32_13 dim 1 : vector<4x512xf32>, i32 -> vector<4x512xf32>
    %133 = vector.extract_strided_slice %1 {offsets = [5, 0], sizes = [1, 512], strides = [1, 1]} : vector<9x512xf32> to vector<1x512xf32>
    %134 = vector.broadcast %133 : vector<1x512xf32> to vector<4x512xf32>
    %135 = arith.mulf %132, %134 : vector<4x512xf32>
    %136 = vector.extract_strided_slice %96 {offsets = [0, 5], sizes = [4, 1], strides = [1, 1]} : vector<4x9xf32> to vector<4x1xf32>
    %137 = vector.broadcast %136 : vector<4x1xf32> to vector<4x512xf32>
    %138 = arith.mulf %135, %137 : vector<4x512xf32>
    %139 = arith.addf %131, %138 : vector<4x512xf32>
    %c497_i32_14 = arith.constant 497 : i32
    %140 = tpu.dynamic_rotate %95 by %c497_i32_14 dim 1 : vector<4x512xf32>, i32 -> vector<4x512xf32>
    %141 = vector.extract_strided_slice %1 {offsets = [6, 0], sizes = [1, 512], strides = [1, 1]} : vector<9x512xf32> to vector<1x512xf32>
    %142 = vector.broadcast %141 : vector<1x512xf32> to vector<4x512xf32>
    %143 = arith.mulf %140, %142 : vector<4x512xf32>
    %144 = vector.extract_strided_slice %96 {offsets = [0, 6], sizes = [4, 1], strides = [1, 1]} : vector<4x9xf32> to vector<4x1xf32>
    %145 = vector.broadcast %144 : vector<4x1xf32> to vector<4x512xf32>
    %146 = arith.mulf %143, %145 : vector<4x512xf32>
    %147 = arith.addf %139, %146 : vector<4x512xf32>
    %c496_i32_15 = arith.constant 496 : i32
    %148 = tpu.dynamic_rotate %95 by %c496_i32_15 dim 1 : vector<4x512xf32>, i32 -> vector<4x512xf32>
    %149 = vector.extract_strided_slice %1 {offsets = [7, 0], sizes = [1, 512], strides = [1, 1]} : vector<9x512xf32> to vector<1x512xf32>
    %150 = vector.broadcast %149 : vector<1x512xf32> to vector<4x512xf32>
    %151 = arith.mulf %148, %150 : vector<4x512xf32>
    %152 = vector.extract_strided_slice %96 {offsets = [0, 7], sizes = [4, 1], strides = [1, 1]} : vector<4x9xf32> to vector<4x1xf32>
    %153 = vector.broadcast %152 : vector<4x1xf32> to vector<4x512xf32>
    %154 = arith.mulf %151, %153 : vector<4x512xf32>
    %155 = arith.addf %147, %154 : vector<4x512xf32>
    %c495_i32_16 = arith.constant 495 : i32
    %156 = tpu.dynamic_rotate %95 by %c495_i32_16 dim 1 : vector<4x512xf32>, i32 -> vector<4x512xf32>
    %157 = vector.extract_strided_slice %1 {offsets = [8, 0], sizes = [1, 512], strides = [1, 1]} : vector<9x512xf32> to vector<1x512xf32>
    %158 = vector.broadcast %157 : vector<1x512xf32> to vector<4x512xf32>
    %159 = arith.mulf %156, %158 : vector<4x512xf32>
    %160 = vector.extract_strided_slice %96 {offsets = [0, 8], sizes = [4, 1], strides = [1, 1]} : vector<4x9xf32> to vector<4x1xf32>
    %161 = vector.broadcast %160 : vector<4x1xf32> to vector<4x512xf32>
    %162 = arith.mulf %159, %161 : vector<4x512xf32>
    %163 = arith.addf %155, %162 : vector<4x512xf32>
    %c0_17 = arith.constant 0 : index
    %c0_18 = arith.constant 0 : index
    %164 = vector.load %arg6[%c0_17, %c0_18] : memref<8x4xf32, #tpu.memory_space<vmem>>, vector<8x4xf32>
    %165 = vector.extract_strided_slice %164 {offsets = [0, 0], sizes = [8, 1], strides = [1, 1]} : vector<8x4xf32> to vector<8x1xf32>
    %166 = vector.extract_strided_slice %163 {offsets = [0, 0], sizes = [1, 512], strides = [1, 1]} : vector<4x512xf32> to vector<1x512xf32>
    %167 = vector.broadcast %165 : vector<8x1xf32> to vector<8x512xf32>
    %168 = vector.broadcast %166 : vector<1x512xf32> to vector<8x512xf32>
    %169 = arith.mulf %167, %168 : vector<8x512xf32>
    %170 = vector.extract_strided_slice %164 {offsets = [0, 1], sizes = [8, 1], strides = [1, 1]} : vector<8x4xf32> to vector<8x1xf32>
    %171 = vector.extract_strided_slice %163 {offsets = [1, 0], sizes = [1, 512], strides = [1, 1]} : vector<4x512xf32> to vector<1x512xf32>
    %172 = vector.broadcast %170 : vector<8x1xf32> to vector<8x512xf32>
    %173 = vector.broadcast %171 : vector<1x512xf32> to vector<8x512xf32>
    %174 = arith.mulf %172, %173 : vector<8x512xf32>
    %175 = arith.addf %169, %174 : vector<8x512xf32>
    %176 = vector.extract_strided_slice %164 {offsets = [0, 2], sizes = [8, 1], strides = [1, 1]} : vector<8x4xf32> to vector<8x1xf32>
    %177 = vector.extract_strided_slice %163 {offsets = [2, 0], sizes = [1, 512], strides = [1, 1]} : vector<4x512xf32> to vector<1x512xf32>
    %178 = vector.broadcast %176 : vector<8x1xf32> to vector<8x512xf32>
    %179 = vector.broadcast %177 : vector<1x512xf32> to vector<8x512xf32>
    %180 = arith.mulf %178, %179 : vector<8x512xf32>
    %181 = arith.addf %175, %180 : vector<8x512xf32>
    %182 = vector.extract_strided_slice %164 {offsets = [0, 3], sizes = [8, 1], strides = [1, 1]} : vector<8x4xf32> to vector<8x1xf32>
    %183 = vector.extract_strided_slice %163 {offsets = [3, 0], sizes = [1, 512], strides = [1, 1]} : vector<4x512xf32> to vector<1x512xf32>
    %184 = vector.broadcast %182 : vector<8x1xf32> to vector<8x512xf32>
    %185 = vector.broadcast %183 : vector<1x512xf32> to vector<8x512xf32>
    %186 = arith.mulf %184, %185 : vector<8x512xf32>
    %187 = arith.addf %181, %186 : vector<8x512xf32>
    %c0_19 = arith.constant 0 : index
    %c0_20 = arith.constant 0 : index
    %188 = vector.load %arg7[%c0_19, %c0_20] : memref<8x512xf32, #tpu.memory_space<vmem>>, vector<8x512xf32>
    tpu.vector_store %arg7[%c0_19, %c0_20], %187 {strides = array<i32>} : memref<8x512xf32, #tpu.memory_space<vmem>>, vector<8x512xf32>,
    return
  }
  func.func @transform_0(%arg0: i32) -> (i32, i32) {
    %c0_i32 = arith.constant 0 : i32
    %c0_i32_0 = arith.constant 0 : i32
    return %c0_i32, %arg0 : i32, i32
  }
  func.func @transform_1(%arg0: i32) -> (i32, i32) {
    %c0_i32 = arith.constant 0 : i32
    %c0_i32_0 = arith.constant 0 : i32
    return %c0_i32, %arg0 : i32, i32
  }
  func.func @transform_2(%arg0: i32) -> (i32, i32) {
    %c0_i32 = arith.constant 0 : i32
    %c0_i32_0 = arith.constant 0 : i32
    %c0_i32_1 = arith.constant 0 : i32
    return %c0_i32, %c0_i32_0 : i32, i32
  }
  func.func @transform_3(%arg0: i32) -> (i32, i32) {
    %c0_i32 = arith.constant 0 : i32
    %c0_i32_0 = arith.constant 0 : i32
    %c0_i32_1 = arith.constant 0 : i32
    return %c0_i32, %c0_i32_0 : i32, i32
  }
  func.func @transform_4(%arg0: i32) -> (i32, i32) {
    %c0_i32 = arith.constant 0 : i32
    %c0_i32_0 = arith.constant 0 : i32
    %c0_i32_1 = arith.constant 0 : i32
    return %c0_i32, %c0_i32_0 : i32, i32
  }
  func.func @transform_5(%arg0: i32) -> (i32, i32) {
    %c0_i32 = arith.constant 0 : i32
    %c0_i32_0 = arith.constant 0 : i32
    %c0_i32_1 = arith.constant 0 : i32
    return %c0_i32, %c0_i32_0 : i32, i32
  }
  func.func @transform_6(%arg0: i32) -> (i32, i32) {
    %c0_i32 = arith.constant 0 : i32
    %c0_i32_0 = arith.constant 0 : i32
    return %c0_i32, %arg0 : i32, i32
  }
}

</mosaic_0001>

<llo_original>
// kernel: tpu_custom_call.1
$region0: #{tpu_custom_call.1}
  #allocation0 [shape = 'u32[]', space=smem, size = 0x4, offset = 0x4, fixed_abs, tag = 'smem constant byte address 0x4 - core index']
  #allocation1 [shape = 'u32[144,128]{1,0:T(1,128)}', space=vmem, size = 0x12000, scoped, tag = 'internal scratch']
  %s0 = inlined_call_operand.hbm [shape: f32[4,512], index: 0, kind: input, shape index: {}]
  %s1 = inlined_call_operand.hbm [shape: f32[9,512], index: 1, kind: input, shape index: {}]
  %s2 = inlined_call_operand.vmem [shape: f32[4,9], index: 2, kind: input, shape index: {}]
  %s3 = inlined_call_operand.vmem [shape: f32[4,4], index: 3, kind: input, shape index: {}]
  %s4 = inlined_call_operand.vmem [shape: f32[4,9], index: 4, kind: input, shape index: {}]
  %s5 = inlined_call_operand.vmem [shape: f32[8,4], index: 5, kind: input, shape index: {}]
  %s6 = inlined_call_operand.hbm [shape: f32[8,512], index: 6, kind: output, shape index: {}]
  %s7 = sld [smem:[#allocation0]]
  $region42: #{tpu_custom_call.1} parent=0
    _
  %s9 = ssub.s32 1, %s7
  %s10 = scalar_select 0, %s9, %s7
  $region1: #{tpu_custom_call.1} parent=0
    #allocation2 [shape = 'u8[8192]{0}', space=vmem, size = 0x2000, scoped, tag = 'input window, operand 0, single buffered']
    #allocation3 [shape = 's32[1]{0}', space=sflag, size = 0x4, scoped, tag = 'scoped memory for tpu_custom_call.1']
    #allocation4 [shape = 's32[1]{0}', space=sflag, size = 0x4, scoped, tag = 'scoped memory for tpu_custom_call.1']
    #allocation5 [shape = 'u8[32768]{0}', space=vmem, size = 0x8000, scoped, tag = 'input window, operand 1, single buffered']
    #allocation6 [shape = 's32[1]{0}', space=sflag, size = 0x4, scoped, tag = 'scoped memory for tpu_custom_call.1']
    #allocation7 [shape = 'u8[16384]{0}', space=vmem, size = 0x4000, scoped, tag = 'output window, operand 0, single buffered']
    %11 = vsyncpa [#allocation3], 0
    %12 = vsyncpa [#allocation6], 0
    %13 = vsyncpa [#allocation4], 0
    // Predicated region
    $region2: #{tpu_custom_call.1} parent=1 // pred_check
      _
    $region3: #{tpu_custom_call.1} parent=1 // pred_check_branch
      %15 = sbr.rel (0) target = $region5
    $region4: #{tpu_custom_call.1} parent=1 // pred_region
      %s17 = ssub.s32 256, 256
      %18 = vsyncadd [#allocation3], %s17
      %s20 = sshll.u32 [#allocation2], 4
      %s21 = int_to_ptr.vmem [resolvable:$true] %s20
      %23 = dma.hbm_to_vmem [thread:$0]  %s0, 256, %s21, [#allocation3]
    $region5: #{tpu_custom_call.1} parent=1 // pred_fallthru
      _
    // Predicated region
    $region6: #{tpu_custom_call.1} parent=1 // pred_check
      _
    $region7: #{tpu_custom_call.1} parent=1 // pred_check_branch
      %25 = sbr.rel (0) target = $region9
    $region8: #{tpu_custom_call.1} parent=1 // pred_region
      %s27 = ssub.s32 1024, 1024
      %28 = vsyncadd [#allocation6], %s27
      %s29 = sshll.u32 [#allocation5], 4
      %s30 = int_to_ptr.vmem [resolvable:$true] %s29
      %35 = dma.hbm_to_vmem [thread:$0]  %s1, 1024, %s30, [#allocation6], 512, 512, 32
    $region9: #{tpu_custom_call.1} parent=1 // pred_fallthru
      _
    // Predicated region
    $region10: #{tpu_custom_call.1} parent=1 // pred_check
      _
    $region11: #{tpu_custom_call.1} parent=1 // pred_check_branch
      %37 = sbr.rel (0) target = $region13
    $region12: #{tpu_custom_call.1} parent=1 // pred_region
      _
    $region13: #{tpu_custom_call.1} parent=1 // pred_fallthru
      _
    // Predicated region
    $region14: #{tpu_custom_call.1} parent=1 // pred_check
      _
    $region15: #{tpu_custom_call.1} parent=1 // pred_check_branch
      %39 = sbr.rel (0) target = $region17
    $region16: #{tpu_custom_call.1} parent=1 // pred_region
      _
    $region17: #{tpu_custom_call.1} parent=1 // pred_fallthru
      _
    // Predicated region
    $region18: #{tpu_custom_call.1} parent=1 // pred_check
      _
    $region19: #{tpu_custom_call.1} parent=1 // pred_check_branch
      %41 = sbr.rel (0) target = $region21
    $region20: #{tpu_custom_call.1} parent=1 // pred_region
      _
    $region21: #{tpu_custom_call.1} parent=1 // pred_fallthru
      _
    // Predicated region
    $region22: #{tpu_custom_call.1} parent=1 // pred_check
      _
    $region23: #{tpu_custom_call.1} parent=1 // pred_check_branch
      %43 = sbr.rel (0) target = $region25
    $region24: #{tpu_custom_call.1} parent=1 // pred_region
      _
    $region25: #{tpu_custom_call.1} parent=1 // pred_fallthru
      _
    // Predicated region
    $region26: #{tpu_custom_call.1} parent=1 // pred_check
      _
    $region27: #{tpu_custom_call.1} parent=1 // pred_check_branch
      %45 = sbr.rel (0) target = $region29
    $region28: #{tpu_custom_call.1} parent=1 // pred_region
      %46 = dma.done [#allocation3], 256
    $region29: #{tpu_custom_call.1} parent=1 // pred_fallthru
      _
    // Predicated region
    $region30: #{tpu_custom_call.1} parent=1 // pred_check
      _
    $region31: #{tpu_custom_call.1} parent=1 // pred_check_branch
      %48 = sbr.rel (0) target = $region33
    $region32: #{tpu_custom_call.1} parent=1 // pred_region
      %49 = dma.done [#allocation6], 1024
    $region33: #{tpu_custom_call.1} parent=1 // pred_fallthru
      _
    %v50 = vld [vmem:[#allocation2] sm:$0xff]
    %v51 = vld [vmem:[#allocation2 + $0x8] sm:$0xff]
    %v52 = vld [vmem:[#allocation5] sm:$0xff]
    %v53 = vld [vmem:[#allocation5 + $0x8] sm:$0xff]
    %v54 = vld [vmem:[#allocation5 + $0x10] sm:$0xff]
    %v55 = vld [vmem:[#allocation5 + $0x18] sm:$0xff]
    %v56 = vld [vmem:[#allocation5 + $0x20] sm:$0x1]
    %v57 = vld [vmem:[#allocation5 + $0x28] sm:$0x1]
    %v58 = vld [vmem:[#allocation5 + $0x30] sm:$0x1]
    %v59 = vld [vmem:[#allocation5 + $0x38] sm:$0x1]
    %v60 = vld [vmem:[%s2] sm:$0xf]
    %v63 = vcombine.high %v50, %v50
    %v64 = vcombine.high %v51, %v51
    %67 = vrot.lane.b32.xlu0 %v50, 17
    %v68 = vpop.permute.xlu0 %67
    %69 = vrot.lane.b32.xlu0 %v63, 17
    %v70 = vpop.permute.xlu0 %69
    %71 = vrot.lane.b32.xlu0 %v51, 17
    %v72 = vpop.permute.xlu0 %71
    %73 = vrot.lane.b32.xlu0 %v64, 17
    %v74 = vpop.permute.xlu0 %73
    %v75 = vlaneseq
    %v76 = vand.u32 %v75, 127
    %vm77 = vcmp.lt.s32.totalorder %v76, 17
    %v78 = vsel %vm77, %v72, %v74
    %v79 = vsel %vm77, %v70, %v72
    %v80 = vsel %vm77, %v68, %v70
    %v81 = vsel %vm77, %v74, %v68
    %v82 = vlaneseq
    %v83 = vshrl.u32 %v82, 7
    %v84 = vsub.s32 0, %v83
    %v85 = vrot.slane %v52, %v84
    %v86 = vlaneseq
    %v87 = vshrl.u32 %v86, 7
    %v88 = vsub.s32 0, %v87
    %v89 = vrot.slane %v53, %v88
    %v90 = vlaneseq
    %v91 = vshrl.u32 %v90, 7
    %v92 = vsub.s32 0, %v91
    %v93 = vrot.slane %v54, %v92
    %v94 = vlaneseq
    %v95 = vshrl.u32 %v94, 7
    %v96 = vsub.s32 0, %v95
    %v97 = vrot.slane %v55, %v96
    %v98 = vmul.f32 %v81, %v85
    %v99 = vmul.f32 %v80, %v89
    %v100 = vmul.f32 %v79, %v93
    %v101 = vmul.f32 %v78, %v97
    %103 = vset.pattern.permute.xlu0 0
    %104 = vperm.xlu0 %103, %v60
    %v105 = vpop.permute.xlu0 %104
    %v107 = vmul.f32 %v98, %v105
    %v108 = vmul.f32 %v99, %v105
    %v109 = vmul.f32 %v100, %v105
    %v110 = vmul.f32 %v101, %v105
    %111 = vrot.lane.b32.xlu0 %v50, 16
    %v112 = vpop.permute.xlu0 %111
    %113 = vrot.lane.b32.xlu0 %v63, 16
    %v114 = vpop.permute.xlu0 %113
    %115 = vrot.lane.b32.xlu0 %v51, 16
    %v116 = vpop.permute.xlu0 %115
    %117 = vrot.lane.b32.xlu0 %v64, 16
    %v118 = vpop.permute.xlu0 %117
    %vm119 = vcmp.lt.s32.totalorder %v76, 16
    %v120 = vsel %vm119, %v116, %v118
    %v121 = vsel %vm119, %v114, %v116
    %v122 = vsel %vm119, %v112, %v114
    %v123 = vsel %vm119, %v118, %v112
    %v124 = vlaneseq
    %v125 = vshrl.u32 %v124, 7
    %v126 = vsub.s32 1, %v125
    %v127 = vrot.slane %v52, %v126
    %v128 = vlaneseq
    %v129 = vshrl.u32 %v128, 7
    %v130 = vsub.s32 1, %v129
    %v131 = vrot.slane %v53, %v130
    %v132 = vlaneseq
    %v133 = vshrl.u32 %v132, 7
    %v134 = vsub.s32 1, %v133
    %v135 = vrot.slane %v54, %v134
    %v136 = vlaneseq
    %v137 = vshrl.u32 %v136, 7
    %v138 = vsub.s32 1, %v137
    %v139 = vrot.slane %v55, %v138
    %v140 = vmul.f32 %v123, %v127
    %v141 = vmul.f32 %v122, %v131
    %v142 = vmul.f32 %v121, %v135
    %v143 = vmul.f32 %v120, %v139
    %144 = vset.pattern.permute.xlu0 1
    %145 = vperm.xlu0 %144, %v60
    %v146 = vpop.permute.xlu0 %145
    %v148 = vmul.f32 %v140, %v146
    %v149 = vmul.f32 %v141, %v146
    %v150 = vmul.f32 %v142, %v146
    %v151 = vmul.f32 %v143, %v146
    %v152 = vadd.f32 %v107, %v148
    %v153 = vadd.f32 %v108, %v149
    %v154 = vadd.f32 %v109, %v150
    %v155 = vadd.f32 %v110, %v151
    %156 = vrot.lane.b32.xlu0 %v50, 15
    %v157 = vpop.permute.xlu0 %156
    %158 = vrot.lane.b32.xlu0 %v63, 15
    %v159 = vpop.permute.xlu0 %158
    %160 = vrot.lane.b32.xlu0 %v51, 15
    %v161 = vpop.permute.xlu0 %160
    %162 = vrot.lane.b32.xlu0 %v64, 15
    %v163 = vpop.permute.xlu0 %162
    %vm164 = vcmp.lt.s32.totalorder %v76, 15
    %v165 = vsel %vm164, %v161, %v163
    %v166 = vsel %vm164, %v159, %v161
    %v167 = vsel %vm164, %v157, %v159
    %v168 = vsel %vm164, %v163, %v157
    %v169 = vlaneseq
    %v170 = vshrl.u32 %v169, 7
    %v171 = vsub.s32 2, %v170
    %v172 = vrot.slane %v52, %v171
    %v173 = vlaneseq
    %v174 = vshrl.u32 %v173, 7
    %v175 = vsub.s32 2, %v174
    %v176 = vrot.slane %v53, %v175
    %v177 = vlaneseq
    %v178 = vshrl.u32 %v177, 7
    %v179 = vsub.s32 2, %v178
    %v180 = vrot.slane %v54, %v179
    %v181 = vlaneseq
    %v182 = vshrl.u32 %v181, 7
    %v183 = vsub.s32 2, %v182
    %v184 = vrot.slane %v55, %v183
    %v185 = vmul.f32 %v168, %v172
    %v186 = vmul.f32 %v167, %v176
    %v187 = vmul.f32 %v166, %v180
    %v188 = vmul.f32 %v165, %v184
    %189 = vset.pattern.permute.xlu0 2
    %190 = vperm.xlu0 %189, %v60
    %v191 = vpop.permute.xlu0 %190
    %v193 = vmul.f32 %v185, %v191
    %v194 = vmul.f32 %v186, %v191
    %v195 = vmul.f32 %v187, %v191
    %v196 = vmul.f32 %v188, %v191
    %v197 = vadd.f32 %v152, %v193
    %v198 = vadd.f32 %v153, %v194
    %v199 = vadd.f32 %v154, %v195
    %v200 = vadd.f32 %v155, %v196
    %201 = vrot.lane.b32.xlu0 %v50, 1
    %v202 = vpop.permute.xlu0 %201
    %203 = vrot.lane.b32.xlu0 %v63, 1
    %v204 = vpop.permute.xlu0 %203
    %205 = vrot.lane.b32.xlu0 %v51, 1
    %v206 = vpop.permute.xlu0 %205
    %207 = vrot.lane.b32.xlu0 %v64, 1
    %v208 = vpop.permute.xlu0 %207
    %vm209 = vcmp.lt.s32.totalorder %v76, 1
    %v210 = vsel %vm209, %v206, %v208
    %v211 = vsel %vm209, %v204, %v206
    %v212 = vsel %vm209, %v202, %v204
    %v213 = vsel %vm209, %v208, %v202
    %v214 = vlaneseq
    %v215 = vshrl.u32 %v214, 7
    %v216 = vsub.s32 3, %v215
    %v217 = vrot.slane %v52, %v216
    %v218 = vlaneseq
    %v219 = vshrl.u32 %v218, 7
    %v220 = vsub.s32 3, %v219
    %v221 = vrot.slane %v53, %v220
    %v222 = vlaneseq
    %v223 = vshrl.u32 %v222, 7
    %v224 = vsub.s32 3, %v223
    %v225 = vrot.slane %v54, %v224
    %v226 = vlaneseq
    %v227 = vshrl.u32 %v226, 7
    %v228 = vsub.s32 3, %v227
    %v229 = vrot.slane %v55, %v228
    %v230 = vmul.f32 %v213, %v217
    %v231 = vmul.f32 %v212, %v221
    %v232 = vmul.f32 %v211, %v225
    %v233 = vmul.f32 %v210, %v229
    %234 = vset.pattern.permute.xlu0 3
    %235 = vperm.xlu0 %234, %v60
    %v236 = vpop.permute.xlu0 %235
    %v238 = vmul.f32 %v230, %v236
    %v239 = vmul.f32 %v231, %v236
    %v240 = vmul.f32 %v232, %v236
    %v241 = vmul.f32 %v233, %v236
    %v242 = vadd.f32 %v197, %v238
    %v243 = vadd.f32 %v198, %v239
    %v244 = vadd.f32 %v199, %v240
    %v245 = vadd.f32 %v200, %v241
    %246 = vset.pattern.permute.xlu0 4
    %247 = vperm.xlu0 %246, %v60
    %v248 = vpop.permute.xlu0 %247
    %v250 = vunpack.c.l.s4 839922192
    %v251 = vunpack.c.0.s8 %v250
    %v252 = vlaneseq
    %v253 = vshrl.u32 %v252, 7
    %v254 = vsub.s32 %v251, %v253
    %v255 = vrot.slane %v248, %v254
    %v257 = vmul.f32 %v50, %v255
    %v258 = vmul.f32 %v51, %v255
    %v261 = vcombine.high %v257, %v257
    %v262 = vcombine.high %v258, %v258
    %v265 = vadd.f32 %v242, %v257
    %v266 = vadd.f32 %v243, %v261
    %v267 = vadd.f32 %v244, %v258
    %v268 = vadd.f32 %v245, %v262
    %269 = vrot.lane.b32.xlu0 %v50, 127
    %v270 = vpop.permute.xlu0 %269
    %271 = vrot.lane.b32.xlu0 %v63, 127
    %v272 = vpop.permute.xlu0 %271
    %273 = vrot.lane.b32.xlu0 %v51, 127
    %v274 = vpop.permute.xlu0 %273
    %275 = vrot.lane.b32.xlu0 %v64, 127
    %v276 = vpop.permute.xlu0 %275
    %vm277 = vcmp.lt.s32.totalorder %v76, 127
    %v278 = vsel %vm277, %v274, %v276
    %v279 = vsel %vm277, %v272, %v274
    %v280 = vsel %vm277, %v270, %v272
    %v281 = vsel %vm277, %v276, %v270
    %v282 = vlaneseq
    %v283 = vshrl.u32 %v282, 7
    %v284 = vsub.s32 5, %v283
    %v285 = vrot.slane %v52, %v284
    %v286 = vlaneseq
    %v287 = vshrl.u32 %v286, 7
    %v288 = vsub.s32 5, %v287
    %v289 = vrot.slane %v53, %v288
    %v290 = vlaneseq
    %v291 = vshrl.u32 %v290, 7
    %v292 = vsub.s32 5, %v291
    %v293 = vrot.slane %v54, %v292
    %v294 = vlaneseq
    %v295 = vshrl.u32 %v294, 7
    %v296 = vsub.s32 5, %v295
    %v297 = vrot.slane %v55, %v296
    %v298 = vmul.f32 %v280, %v285
    %v299 = vmul.f32 %v279, %v289
    %v300 = vmul.f32 %v278, %v293
    %v301 = vmul.f32 %v281, %v297
    %302 = vset.pattern.permute.xlu0 5
    %303 = vperm.xlu0 %302, %v60
    %v304 = vpop.permute.xlu0 %303
    %v306 = vmul.f32 %v298, %v304
    %v307 = vmul.f32 %v299, %v304
    %v308 = vmul.f32 %v300, %v304
    %v309 = vmul.f32 %v301, %v304
    %v310 = vadd.f32 %v265, %v306
    %v311 = vadd.f32 %v266, %v307
    %v312 = vadd.f32 %v267, %v308
    %v313 = vadd.f32 %v268, %v309
    %314 = vrot.lane.b32.xlu0 %v50, 113
    %v315 = vpop.permute.xlu0 %314
    %316 = vrot.lane.b32.xlu0 %v63, 113
    %v317 = vpop.permute.xlu0 %316
    %318 = vrot.lane.b32.xlu0 %v51, 113
    %v319 = vpop.permute.xlu0 %318
    %320 = vrot.lane.b32.xlu0 %v64, 113
    %v321 = vpop.permute.xlu0 %320
    %vm322 = vcmp.lt.s32.totalorder %v76, 113
    %v323 = vsel %vm322, %v319, %v321
    %v324 = vsel %vm322, %v317, %v319
    %v325 = vsel %vm322, %v315, %v317
    %v326 = vsel %vm322, %v321, %v315
    %v327 = vlaneseq
    %v328 = vshrl.u32 %v327, 7
    %v329 = vsub.s32 6, %v328
    %v330 = vrot.slane %v52, %v329
    %v331 = vlaneseq
    %v332 = vshrl.u32 %v331, 7
    %v333 = vsub.s32 6, %v332
    %v334 = vrot.slane %v53, %v333
    %v335 = vlaneseq
    %v336 = vshrl.u32 %v335, 7
    %v337 = vsub.s32 6, %v336
    %v338 = vrot.slane %v54, %v337
    %v339 = vlaneseq
    %v340 = vshrl.u32 %v339, 7
    %v341 = vsub.s32 6, %v340
    %v342 = vrot.slane %v55, %v341
    %v343 = vmul.f32 %v325, %v330
    %v344 = vmul.f32 %v324, %v334
    %v345 = vmul.f32 %v323, %v338
    %v346 = vmul.f32 %v326, %v342
    %347 = vset.pattern.permute.xlu0 6
    %348 = vperm.xlu0 %347, %v60
    %v349 = vpop.permute.xlu0 %348
    %v351 = vmul.f32 %v343, %v349
    %v352 = vmul.f32 %v344, %v349
    %v353 = vmul.f32 %v345, %v349
    %v354 = vmul.f32 %v346, %v349
    %v355 = vadd.f32 %v310, %v351
    %v356 = vadd.f32 %v311, %v352
    %v357 = vadd.f32 %v312, %v353
    %v358 = vadd.f32 %v313, %v354
    %359 = vrot.lane.b32.xlu0 %v50, 112
    %v360 = vpop.permute.xlu0 %359
    %361 = vrot.lane.b32.xlu0 %v63, 112
    %v362 = vpop.permute.xlu0 %361
    %363 = vrot.lane.b32.xlu0 %v51, 112
    %v364 = vpop.permute.xlu0 %363
    %365 = vrot.lane.b32.xlu0 %v64, 112
    %v366 = vpop.permute.xlu0 %365
    %vm367 = vcmp.lt.s32.totalorder %v76, 112
    %v368 = vsel %vm367, %v364, %v366
    %v369 = vsel %vm367, %v362, %v364
    %v370 = vsel %vm367, %v360, %v362
    %v371 = vsel %vm367, %v366, %v360
    %v372 = vlaneseq
    %v373 = vshrl.u32 %v372, 7
    %v374 = vsub.s32 7, %v373
    %v375 = vrot.slane %v52, %v374
    %v376 = vlaneseq
    %v377 = vshrl.u32 %v376, 7
    %v378 = vsub.s32 7, %v377
    %v379 = vrot.slane %v53, %v378
    %v380 = vlaneseq
    %v381 = vshrl.u32 %v380, 7
    %v382 = vsub.s32 7, %v381
    %v383 = vrot.slane %v54, %v382
    %v384 = vlaneseq
    %v385 = vshrl.u32 %v384, 7
    %v386 = vsub.s32 7, %v385
    %v387 = vrot.slane %v55, %v386
    %v388 = vmul.f32 %v370, %v375
    %v389 = vmul.f32 %v369, %v379
    %v390 = vmul.f32 %v368, %v383
    %v391 = vmul.f32 %v371, %v387
    %392 = vset.pattern.permute.xlu0 7
    %393 = vperm.xlu0 %392, %v60
    %v394 = vpop.permute.xlu0 %393
    %v396 = vmul.f32 %v388, %v394
    %v397 = vmul.f32 %v389, %v394
    %v398 = vmul.f32 %v390, %v394
    %v399 = vmul.f32 %v391, %v394
    %v400 = vadd.f32 %v355, %v396
    %v401 = vadd.f32 %v356, %v397
    %v402 = vadd.f32 %v357, %v398
    %v403 = vadd.f32 %v358, %v399
    %404 = vrot.lane.b32.xlu0 %v50, 111
    %v405 = vpop.permute.xlu0 %404
    %406 = vrot.lane.b32.xlu0 %v63, 111
    %v407 = vpop.permute.xlu0 %406
    %408 = vrot.lane.b32.xlu0 %v51, 111
    %v409 = vpop.permute.xlu0 %408
    %410 = vrot.lane.b32.xlu0 %v64, 111
    %v411 = vpop.permute.xlu0 %410
    %vm412 = vcmp.lt.s32.totalorder %v76, 111
    %v413 = vsel %vm412, %v409, %v411
    %v414 = vsel %vm412, %v407, %v409
    %v415 = vsel %vm412, %v405, %v407
    %v416 = vsel %vm412, %v411, %v405
    %v417 = vlaneseq
    %v418 = vshrl.u32 %v417, 7
    %v419 = vsub.s32 0, %v418
    %v420 = vrot.slane %v56, %v419
    %v421 = vlaneseq
    %v422 = vshrl.u32 %v421, 7
    %v423 = vsub.s32 0, %v422
    %v424 = vrot.slane %v57, %v423
    %v425 = vlaneseq
    %v426 = vshrl.u32 %v425, 7
    %v427 = vsub.s32 0, %v426
    %v428 = vrot.slane %v58, %v427
    %v429 = vlaneseq
    %v430 = vshrl.u32 %v429, 7
    %v431 = vsub.s32 0, %v430
    %v432 = vrot.slane %v59, %v431
    %v433 = vmul.f32 %v415, %v420
    %v434 = vmul.f32 %v414, %v424
    %v435 = vmul.f32 %v413, %v428
    %v436 = vmul.f32 %v416, %v432
    %437 = vset.pattern.permute.xlu0 8
    %438 = vperm.xlu0 %437, %v60
    %v439 = vpop.permute.xlu0 %438
    %v441 = vmul.f32 %v433, %v439
    %v442 = vmul.f32 %v434, %v439
    %v443 = vmul.f32 %v435, %v439
    %v444 = vmul.f32 %v436, %v439
    %v445 = vadd.f32 %v400, %v441
    %v446 = vadd.f32 %v401, %v442
    %v447 = vadd.f32 %v402, %v443
    %v448 = vadd.f32 %v403, %v444
    %v449 = vld [vmem:[%s3] sm:$0xf]
    %451 = vset.pattern.permute.xlu0 0
    %452 = vperm.xlu0 %451, %v449
    %v453 = vpop.permute.xlu0 %452
    %v455 = vlaneseq
    %v456 = vshrl.u32 %v455, 7
    %v457 = vsub.s32 0, %v456
    %v458 = vrot.slane %v445, %v457
    %v459 = vlaneseq
    %v460 = vshrl.u32 %v459, 7
    %v461 = vsub.s32 0, %v460
    %v462 = vrot.slane %v446, %v461
    %v463 = vlaneseq
    %v464 = vshrl.u32 %v463, 7
    %v465 = vsub.s32 0, %v464
    %v466 = vrot.slane %v447, %v465
    %v467 = vlaneseq
    %v468 = vshrl.u32 %v467, 7
    %v469 = vsub.s32 0, %v468
    %v470 = vrot.slane %v448, %v469
    %v471 = vmul.f32 %v453, %v458
    %v472 = vmul.f32 %v453, %v462
    %v473 = vmul.f32 %v453, %v466
    %v474 = vmul.f32 %v453, %v470
    %475 = vset.pattern.permute.xlu0 1
    %476 = vperm.xlu0 %475, %v449
    %v477 = vpop.permute.xlu0 %476
    %v479 = vlaneseq
    %v480 = vshrl.u32 %v479, 7
    %v481 = vsub.s32 1, %v480
    %v482 = vrot.slane %v445, %v481
    %v483 = vlaneseq
    %v484 = vshrl.u32 %v483, 7
    %v485 = vsub.s32 1, %v484
    %v486 = vrot.slane %v446, %v485
    %v487 = vlaneseq
    %v488 = vshrl.u32 %v487, 7
    %v489 = vsub.s32 1, %v488
    %v490 = vrot.slane %v447, %v489
    %v491 = vlaneseq
    %v492 = vshrl.u32 %v491, 7
    %v493 = vsub.s32 1, %v492
    %v494 = vrot.slane %v448, %v493
    %v495 = vmul.f32 %v477, %v482
    %v496 = vmul.f32 %v477, %v486
    %v497 = vmul.f32 %v477, %v490
    %v498 = vmul.f32 %v477, %v494
    %v499 = vadd.f32 %v471, %v495
    %v500 = vadd.f32 %v472, %v496
    %v501 = vadd.f32 %v473, %v497
    %v502 = vadd.f32 %v474, %v498
    %503 = vset.pattern.permute.xlu0 2
    %504 = vperm.xlu0 %503, %v449
    %v505 = vpop.permute.xlu0 %504
    %v507 = vlaneseq
    %v508 = vshrl.u32 %v507, 7
    %v509 = vsub.s32 2, %v508
    %v510 = vrot.slane %v445, %v509
    %v511 = vlaneseq
    %v512 = vshrl.u32 %v511, 7
    %v513 = vsub.s32 2, %v512
    %v514 = vrot.slane %v446, %v513
    %v515 = vlaneseq
    %v516 = vshrl.u32 %v515, 7
    %v517 = vsub.s32 2, %v516
    %v518 = vrot.slane %v447, %v517
    %v519 = vlaneseq
    %v520 = vshrl.u32 %v519, 7
    %v521 = vsub.s32 2, %v520
    %v522 = vrot.slane %v448, %v521
    %v523 = vmul.f32 %v505, %v510
    %v524 = vmul.f32 %v505, %v514
    %v525 = vmul.f32 %v505, %v518
    %v526 = vmul.f32 %v505, %v522
    %v527 = vadd.f32 %v499, %v523
    %v528 = vadd.f32 %v500, %v524
    %v529 = vadd.f32 %v501, %v525
    %v530 = vadd.f32 %v502, %v526
    %531 = vset.pattern.permute.xlu0 3
    %532 = vperm.xlu0 %531, %v449
    %v533 = vpop.permute.xlu0 %532
    %v535 = vlaneseq
    %v536 = vshrl.u32 %v535, 7
    %v537 = vsub.s32 3, %v536
    %v538 = vrot.slane %v445, %v537
    %v539 = vlaneseq
    %v540 = vshrl.u32 %v539, 7
    %v541 = vsub.s32 3, %v540
    %v542 = vrot.slane %v446, %v541
    %v543 = vlaneseq
    %v544 = vshrl.u32 %v543, 7
    %v545 = vsub.s32 3, %v544
    %v546 = vrot.slane %v447, %v545
    %v547 = vlaneseq
    %v548 = vshrl.u32 %v547, 7
    %v549 = vsub.s32 3, %v548
    %v550 = vrot.slane %v448, %v549
    %v551 = vmul.f32 %v533, %v538
    %v552 = vmul.f32 %v533, %v542
    %v553 = vmul.f32 %v533, %v546
    %v554 = vmul.f32 %v533, %v550
    %v555 = vadd.f32 %v527, %v551
    %v556 = vadd.f32 %v528, %v552
    %v557 = vadd.f32 %v529, %v553
    %v558 = vadd.f32 %v530, %v554
    %v559 = vmax.f32 %v555, 0.0
    %v560 = vmax.f32 %v556, 0.0
    %v561 = vmax.f32 %v557, 0.0
    %v562 = vmax.f32 %v558, 0.0
    %v563 = vld [vmem:[%s4] sm:$0xf]
    %564 = vrot.lane.b32.xlu0 %v559, 17
    %v565 = vpop.permute.xlu0 %564
    %566 = vrot.lane.b32.xlu0 %v560, 17
    %v567 = vpop.permute.xlu0 %566
    %568 = vrot.lane.b32.xlu0 %v561, 17
    %v569 = vpop.permute.xlu0 %568
    %570 = vrot.lane.b32.xlu0 %v562, 17
    %v571 = vpop.permute.xlu0 %570
    %v572 = vsel %vm77, %v569, %v571
    %v573 = vsel %vm77, %v567, %v569
    %v574 = vsel %vm77, %v565, %v567
    %v575 = vsel %vm77, %v571, %v565
    %v576 = vmul.f32 %v575, %v85
    %v577 = vmul.f32 %v574, %v89
    %v578 = vmul.f32 %v573, %v93
    %v579 = vmul.f32 %v572, %v97
    %581 = vset.pattern.permute.xlu0 0
    %582 = vperm.xlu0 %581, %v563
    %v583 = vpop.permute.xlu0 %582
    %v585 = vmul.f32 %v576, %v583
    %v586 = vmul.f32 %v577, %v583
    %v587 = vmul.f32 %v578, %v583
    %v588 = vmul.f32 %v579, %v583
    %589 = vrot.lane.b32.xlu0 %v559, 16
    %v590 = vpop.permute.xlu0 %589
    %591 = vrot.lane.b32.xlu0 %v560, 16
    %v592 = vpop.permute.xlu0 %591
    %593 = vrot.lane.b32.xlu0 %v561, 16
    %v594 = vpop.permute.xlu0 %593
    %595 = vrot.lane.b32.xlu0 %v562, 16
    %v596 = vpop.permute.xlu0 %595
    %v597 = vsel %vm119, %v594, %v596
    %v598 = vsel %vm119, %v592, %v594
    %v599 = vsel %vm119, %v590, %v592
    %v600 = vsel %vm119, %v596, %v590
    %v601 = vmul.f32 %v600, %v127
    %v602 = vmul.f32 %v599, %v131
    %v603 = vmul.f32 %v598, %v135
    %v604 = vmul.f32 %v597, %v139
    %605 = vset.pattern.permute.xlu0 1
    %606 = vperm.xlu0 %605, %v563
    %v607 = vpop.permute.xlu0 %606
    %v609 = vmul.f32 %v601, %v607
    %v610 = vmul.f32 %v602, %v607
    %v611 = vmul.f32 %v603, %v607
    %v612 = vmul.f32 %v604, %v607
    %v613 = vadd.f32 %v585, %v609
    %v614 = vadd.f32 %v586, %v610
    %v615 = vadd.f32 %v587, %v611
    %v616 = vadd.f32 %v588, %v612
    %617 = vrot.lane.b32.xlu0 %v559, 15
    %v618 = vpop.permute.xlu0 %617
    %619 = vrot.lane.b32.xlu0 %v560, 15
    %v620 = vpop.permute.xlu0 %619
    %621 = vrot.lane.b32.xlu0 %v561, 15
    %v622 = vpop.permute.xlu0 %621
    %623 = vrot.lane.b32.xlu0 %v562, 15
    %v624 = vpop.permute.xlu0 %623
    %v625 = vsel %vm164, %v622, %v624
    %v626 = vsel %vm164, %v620, %v622
    %v627 = vsel %vm164, %v618, %v620
    %v628 = vsel %vm164, %v624, %v618
    %v629 = vmul.f32 %v628, %v172
    %v630 = vmul.f32 %v627, %v176
    %v631 = vmul.f32 %v626, %v180
    %v632 = vmul.f32 %v625, %v184
    %633 = vset.pattern.permute.xlu0 2
    %634 = vperm.xlu0 %633, %v563
    %v635 = vpop.permute.xlu0 %634
    %v637 = vmul.f32 %v629, %v635
    %v638 = vmul.f32 %v630, %v635
    %v639 = vmul.f32 %v631, %v635
    %v640 = vmul.f32 %v632, %v635
    %v641 = vadd.f32 %v613, %v637
    %v642 = vadd.f32 %v614, %v638
    %v643 = vadd.f32 %v615, %v639
    %v644 = vadd.f32 %v616, %v640
    %645 = vrot.lane.b32.xlu0 %v559, 1
    %v646 = vpop.permute.xlu0 %645
    %647 = vrot.lane.b32.xlu0 %v560, 1
    %v648 = vpop.permute.xlu0 %647
    %649 = vrot.lane.b32.xlu0 %v561, 1
    %v650 = vpop.permute.xlu0 %649
    %651 = vrot.lane.b32.xlu0 %v562, 1
    %v652 = vpop.permute.xlu0 %651
    %v653 = vsel %vm209, %v650, %v652
    %v654 = vsel %vm209, %v648, %v650
    %v655 = vsel %vm209, %v646, %v648
    %v656 = vsel %vm209, %v652, %v646
    %v657 = vmul.f32 %v656, %v217
    %v658 = vmul.f32 %v655, %v221
    %v659 = vmul.f32 %v654, %v225
    %v660 = vmul.f32 %v653, %v229
    %661 = vset.pattern.permute.xlu0 3
    %662 = vperm.xlu0 %661, %v563
    %v663 = vpop.permute.xlu0 %662
    %v665 = vmul.f32 %v657, %v663
    %v666 = vmul.f32 %v658, %v663
    %v667 = vmul.f32 %v659, %v663
    %v668 = vmul.f32 %v660, %v663
    %v669 = vadd.f32 %v641, %v665
    %v670 = vadd.f32 %v642, %v666
    %v671 = vadd.f32 %v643, %v667
    %v672 = vadd.f32 %v644, %v668
    %673 = vset.pattern.permute.xlu0 4
    %674 = vperm.xlu0 %673, %v563
    %v675 = vpop.permute.xlu0 %674
    %v677 = vmul.f32 %v559, %v675
    %v678 = vmul.f32 %v560, %v675
    %v679 = vmul.f32 %v561, %v675
    %v680 = vmul.f32 %v562, %v675
    %v681 = vadd.f32 %v669, %v677
    %v682 = vadd.f32 %v670, %v678
    %v683 = vadd.f32 %v671, %v679
    %v684 = vadd.f32 %v672, %v680
    %685 = vrot.lane.b32.xlu0 %v559, 127
    %v686 = vpop.permute.xlu0 %685
    %687 = vrot.lane.b32.xlu0 %v560, 127
    %v688 = vpop.permute.xlu0 %687
    %689 = vrot.lane.b32.xlu0 %v561, 127
    %v690 = vpop.permute.xlu0 %689
    %691 = vrot.lane.b32.xlu0 %v562, 127
    %v692 = vpop.permute.xlu0 %691
    %v693 = vsel %vm277, %v690, %v692
    %v694 = vsel %vm277, %v688, %v690
    %v695 = vsel %vm277, %v686, %v688
    %v696 = vsel %vm277, %v692, %v686
    %v697 = vmul.f32 %v695, %v285
    %v698 = vmul.f32 %v694, %v289
    %v699 = vmul.f32 %v693, %v293
    %v700 = vmul.f32 %v696, %v297
    %701 = vset.pattern.permute.xlu0 5
    %702 = vperm.xlu0 %701, %v563
    %v703 = vpop.permute.xlu0 %702
    %v705 = vmul.f32 %v697, %v703
    %v706 = vmul.f32 %v698, %v703
    %v707 = vmul.f32 %v699, %v703
    %v708 = vmul.f32 %v700, %v703
    %v709 = vadd.f32 %v681, %v705
    %v710 = vadd.f32 %v682, %v706
    %v711 = vadd.f32 %v683, %v707
    %v712 = vadd.f32 %v684, %v708
    %713 = vrot.lane.b32.xlu0 %v559, 113
    %v714 = vpop.permute.xlu0 %713
    %715 = vrot.lane.b32.xlu0 %v560, 113
    %v716 = vpop.permute.xlu0 %715
    %717 = vrot.lane.b32.xlu0 %v561, 113
    %v718 = vpop.permute.xlu0 %717
    %719 = vrot.lane.b32.xlu0 %v562, 113
    %v720 = vpop.permute.xlu0 %719
    %v721 = vsel %vm322, %v718, %v720
    %v722 = vsel %vm322, %v716, %v718
    %v723 = vsel %vm322, %v714, %v716
    %v724 = vsel %vm322, %v720, %v714
    %v725 = vmul.f32 %v723, %v330
    %v726 = vmul.f32 %v722, %v334
    %v727 = vmul.f32 %v721, %v338
    %v728 = vmul.f32 %v724, %v342
    %729 = vset.pattern.permute.xlu0 6
    %730 = vperm.xlu0 %729, %v563
    %v731 = vpop.permute.xlu0 %730
    %v733 = vmul.f32 %v725, %v731
    %v734 = vmul.f32 %v726, %v731
    %v735 = vmul.f32 %v727, %v731
    %v736 = vmul.f32 %v728, %v731
    %v737 = vadd.f32 %v709, %v733
    %v738 = vadd.f32 %v710, %v734
    %v739 = vadd.f32 %v711, %v735
    %v740 = vadd.f32 %v712, %v736
    %741 = vrot.lane.b32.xlu0 %v559, 112
    %v742 = vpop.permute.xlu0 %741
    %743 = vrot.lane.b32.xlu0 %v560, 112
    %v744 = vpop.permute.xlu0 %743
    %745 = vrot.lane.b32.xlu0 %v561, 112
    %v746 = vpop.permute.xlu0 %745
    %747 = vrot.lane.b32.xlu0 %v562, 112
    %v748 = vpop.permute.xlu0 %747
    %v749 = vsel %vm367, %v746, %v748
    %v750 = vsel %vm367, %v744, %v746
    %v751 = vsel %vm367, %v742, %v744
    %v752 = vsel %vm367, %v748, %v742
    %v753 = vmul.f32 %v751, %v375
    %v754 = vmul.f32 %v750, %v379
    %v755 = vmul.f32 %v749, %v383
    %v756 = vmul.f32 %v752, %v387
    %757 = vset.pattern.permute.xlu0 7
    %758 = vperm.xlu0 %757, %v563
    %v759 = vpop.permute.xlu0 %758
    %v761 = vmul.f32 %v753, %v759
    %v762 = vmul.f32 %v754, %v759
    %v763 = vmul.f32 %v755, %v759
    %v764 = vmul.f32 %v756, %v759
    %v765 = vadd.f32 %v737, %v761
    %v766 = vadd.f32 %v738, %v762
    %v767 = vadd.f32 %v739, %v763
    %v768 = vadd.f32 %v740, %v764
    %769 = vrot.lane.b32.xlu0 %v559, 111
    %v770 = vpop.permute.xlu0 %769
    %771 = vrot.lane.b32.xlu0 %v560, 111
    %v772 = vpop.permute.xlu0 %771
    %773 = vrot.lane.b32.xlu0 %v561, 111
    %v774 = vpop.permute.xlu0 %773
    %775 = vrot.lane.b32.xlu0 %v562, 111
    %v776 = vpop.permute.xlu0 %775
    %v777 = vsel %vm412, %v774, %v776
    %v778 = vsel %vm412, %v772, %v774
    %v779 = vsel %vm412, %v770, %v772
    %v780 = vsel %vm412, %v776, %v770
    %v781 = vmul.f32 %v779, %v420
    %v782 = vmul.f32 %v778, %v424
    %v783 = vmul.f32 %v777, %v428
    %v784 = vmul.f32 %v780, %v432
    %785 = vset.pattern.permute.xlu0 8
    %786 = vperm.xlu0 %785, %v563
    %v787 = vpop.permute.xlu0 %786
    %v789 = vmul.f32 %v781, %v787
    %v790 = vmul.f32 %v782, %v787
    %v791 = vmul.f32 %v783, %v787
    %v792 = vmul.f32 %v784, %v787
    %v793 = vadd.f32 %v765, %v789
    %v794 = vadd.f32 %v766, %v790
    %v795 = vadd.f32 %v767, %v791
    %v796 = vadd.f32 %v768, %v792
    %v797 = vld [vmem:[%s5] sm:$0xff]
    %799 = vset.pattern.permute.xlu0 0
    %800 = vperm.xlu0 %799, %v797
    %v801 = vpop.permute.xlu0 %800
    %v803 = vlaneseq
    %v804 = vshrl.u32 %v803, 7
    %v805 = vsub.s32 0, %v804
    %v806 = vrot.slane %v793, %v805
    %v807 = vlaneseq
    %v808 = vshrl.u32 %v807, 7
    %v809 = vsub.s32 0, %v808
    %v810 = vrot.slane %v794, %v809
    %v811 = vlaneseq
    %v812 = vshrl.u32 %v811, 7
    %v813 = vsub.s32 0, %v812
    %v814 = vrot.slane %v795, %v813
    %v815 = vlaneseq
    %v816 = vshrl.u32 %v815, 7
    %v817 = vsub.s32 0, %v816
    %v818 = vrot.slane %v796, %v817
    %v819 = vmul.f32 %v801, %v806
    %v820 = vmul.f32 %v801, %v810
    %v821 = vmul.f32 %v801, %v814
    %v822 = vmul.f32 %v801, %v818
    %823 = vset.pattern.permute.xlu0 1
    %824 = vperm.xlu0 %823, %v797
    %v825 = vpop.permute.xlu0 %824
    %v827 = vlaneseq
    %v828 = vshrl.u32 %v827, 7
    %v829 = vsub.s32 1, %v828
    %v830 = vrot.slane %v793, %v829
    %v831 = vlaneseq
    %v832 = vshrl.u32 %v831, 7
    %v833 = vsub.s32 1, %v832
    %v834 = vrot.slane %v794, %v833
    %v835 = vlaneseq
    %v836 = vshrl.u32 %v835, 7
    %v837 = vsub.s32 1, %v836
    %v838 = vrot.slane %v795, %v837
    %v839 = vlaneseq
    %v840 = vshrl.u32 %v839, 7
    %v841 = vsub.s32 1, %v840
    %v842 = vrot.slane %v796, %v841
    %v843 = vmul.f32 %v825, %v830
    %v844 = vmul.f32 %v825, %v834
    %v845 = vmul.f32 %v825, %v838
    %v846 = vmul.f32 %v825, %v842
    %v847 = vadd.f32 %v819, %v843
    %v848 = vadd.f32 %v820, %v844
    %v849 = vadd.f32 %v821, %v845
    %v850 = vadd.f32 %v822, %v846
    %851 = vset.pattern.permute.xlu0 2
    %852 = vperm.xlu0 %851, %v797
    %v853 = vpop.permute.xlu0 %852
    %v855 = vlaneseq
    %v856 = vshrl.u32 %v855, 7
    %v857 = vsub.s32 2, %v856
    %v858 = vrot.slane %v793, %v857
    %v859 = vlaneseq
    %v860 = vshrl.u32 %v859, 7
    %v861 = vsub.s32 2, %v860
    %v862 = vrot.slane %v794, %v861
    %v863 = vlaneseq
    %v864 = vshrl.u32 %v863, 7
    %v865 = vsub.s32 2, %v864
    %v866 = vrot.slane %v795, %v865
    %v867 = vlaneseq
    %v868 = vshrl.u32 %v867, 7
    %v869 = vsub.s32 2, %v868
    %v870 = vrot.slane %v796, %v869
    %v871 = vmul.f32 %v853, %v858
    %v872 = vmul.f32 %v853, %v862
    %v873 = vmul.f32 %v853, %v866
    %v874 = vmul.f32 %v853, %v870
    %v875 = vadd.f32 %v847, %v871
    %v876 = vadd.f32 %v848, %v872
    %v877 = vadd.f32 %v849, %v873
    %v878 = vadd.f32 %v850, %v874
    %879 = vset.pattern.permute.xlu0 3
    %880 = vperm.xlu0 %879, %v797
    %v881 = vpop.permute.xlu0 %880
    %v883 = vlaneseq
    %v884 = vshrl.u32 %v883, 7
    %v885 = vsub.s32 3, %v884
    %v886 = vrot.slane %v793, %v885
    %v887 = vlaneseq
    %v888 = vshrl.u32 %v887, 7
    %v889 = vsub.s32 3, %v888
    %v890 = vrot.slane %v794, %v889
    %v891 = vlaneseq
    %v892 = vshrl.u32 %v891, 7
    %v893 = vsub.s32 3, %v892
    %v894 = vrot.slane %v795, %v893
    %v895 = vlaneseq
    %v896 = vshrl.u32 %v895, 7
    %v897 = vsub.s32 3, %v896
    %v898 = vrot.slane %v796, %v897
    %v899 = vmul.f32 %v881, %v886
    %v900 = vmul.f32 %v881, %v890
    %v901 = vmul.f32 %v881, %v894
    %v902 = vmul.f32 %v881, %v898
    %v903 = vadd.f32 %v875, %v899
    %v904 = vadd.f32 %v876, %v900
    %v905 = vadd.f32 %v877, %v901
    %v906 = vadd.f32 %v878, %v902
    %907 = vst [vmem:[#allocation7] sm:$0xff] %v903
    %908 = vst [vmem:[#allocation7 + $0x8] sm:$0xff] %v904
    %909 = vst [vmem:[#allocation7 + $0x10] sm:$0xff] %v905
    %910 = vst [vmem:[#allocation7 + $0x18] sm:$0xff] %v906
    // Predicated region
    $region34: #{tpu_custom_call.1} parent=1 // pred_check
      _
    $region35: #{tpu_custom_call.1} parent=1 // pred_check_branch
      %912 = sbr.rel (0) target = $region37
    $region36: #{tpu_custom_call.1} parent=1 // pred_region
      %s914 = ssub.s32 512, 512
      %915 = vsyncadd [#allocation4], %s914
      %s917 = sshll.u32 [#allocation7], 4
      %s918 = int_to_ptr.vmem [resolvable:$true] %s917
      %920 = dma.vmem_to_hbm [thread:$0]  %s918, 512, %s6, [#allocation4]
    $region37: #{tpu_custom_call.1} parent=1 // pred_fallthru
      _
    // Predicated region
    $region38: #{tpu_custom_call.1} parent=1 // pred_check
      _
    $region39: #{tpu_custom_call.1} parent=1 // pred_check_branch
      %922 = sbr.rel (0) target = $region41
    $region40: #{tpu_custom_call.1} parent=1 // pred_region
      %923 = dma.done [#allocation4], 512
    $region41: #{tpu_custom_call.1} parent=1 // pred_fallthru
      _
    %924 = vsyncpa [#allocation3], 1
    %925 = vsyncpa [#allocation6], 1
    %926 = vsyncpa [#allocation4], 1

</llo_original>
